<compile_context>
chip_gen: v7x
topology: tpu7x:2x2x1
jax: 0.10.0
libtpu: 0.0.40
codegen_flags: <defaults>
</compile_context>

<pallas_src>
from functools import partial

import jax
import jax.numpy as jnp
from jax import lax
from jax.experimental import pallas as pl
from jax.experimental.pallas import tpu as pltpu


def _round_up(x, m):
    return (x + m - 1) // m * m


def _leaky_relu(x, slope=0.2):
    return jnp.where(x > 0, x, slope * x)


def _choose_tb(batch, block_b):
    """Batch tile size.

    * >= 2 grid tiles whenever batch allows, so the 'parallel' axis can split
      across v7x's two TensorCores.
    * 256-aligned for large batches (v6e/v7x MXU M alignment), 8-aligned
      otherwise (tiny batches: extra padding would just be wasted compute).
    """
    cap = max(256, _round_up(block_b, 256))
    if batch <= 16:
        return _round_up(max(batch, 1), 8)
    target = pl.cdiv(batch, 2)            # aim for at least two tiles
    if target >= 256:
        tb = _round_up(target, 256)       # dense MXU M-tiles on v6e/v7x
    else:
        tb = _round_up(target, 8)
    return min(cap, tb)


def _disc_kernel(tok_ref, m_ref, b1_ref, w2_ref, b2_ref, w3_ref, b3_ref,
                 o_ref, *, n_vocab):
    """Fused embedding + MLP head of SmallMusicDiscriminator.

    tok_ref : [TB, S]    int32 token ids
    m_ref   : [SVp, 512] bf16  (embedding table folded into fc1, K-padded)
    b1_ref  : [1, 512]   f32
    w2_ref  : [512, 256] bf16
    b2_ref  : [1, 256]   f32
    w3_ref  : [1, 256]   f32   (fc3 weight as a row)
    b3_ref  : [1, 1]     f32   (SMEM scalar)
    o_ref   : [TB, 1]    f32   (compact logit column)
    """
    toks = tok_ref[...]                                    # [TB, S] int32
    seq_len = toks.shape[1]
    svp = m_ref.shape[0]

    # Fused embedding lookup: one-hot over (position, token) pairs.
    # Single (1, SVp) lane iota (sublane broadcast inside the compare is free),
    # boolean OR accumulation, one final cast straight to bf16.
    lane = lax.broadcasted_iota(jnp.int32, (1, svp), 1)    # [1, SVp]
    mask = toks[:, 0:1] == lane                            # position 0
    for s in range(1, seq_len):                            # S is small & static
        mask = jnp.logical_or(mask,
                              toks[:, s:s + 1] == (lane - s * n_vocab))
    oh = mask.astype(jnp.bfloat16)                         # [TB, SVp]

    # fc1 (embedding folded in) + bias + LeakyReLU. bf16 operands, f32 acc.
    h1 = jnp.dot(oh, m_ref[...], preferred_element_type=jnp.float32)
    h1 = _leaky_relu(h1 + b1_ref[...])
    # (Dropout(0.3): identity in eval mode.)

    # fc2 + bias + LeakyReLU.
    h2 = jnp.dot(h1.astype(jnp.bfloat16), w2_ref[...],
                 preferred_element_type=jnp.float32)
    h2 = _leaky_relu(h2 + b2_ref[...])
    # (Dropout(0.3): identity in eval mode.)

    # fc3 (256 -> 1): VPU multiply + cross-lane reduce (XLU) instead of an
    # N=1 MXU matmul; b3 is a scalar from SMEM.
    out = jnp.sum(h2 * w3_ref[...], axis=-1, keepdims=True) + b3_ref[0, 0]
    o_ref[...] = out.astype(o_ref.dtype)                   # compact [TB, 1]


def small_music_discriminator(tokens, params, *, block_b=512):
    """tokens: [B, S] int token ids -> logits [B, 1] f32."""
    emb = params["embedding"].astype(jnp.float32)          # [V, E]
    w1 = params["w1"].astype(jnp.float32)                  # [S*E, H1]
    V, E = emb.shape
    B, S = tokens.shape
    H1 = w1.shape[1]
    H2 = params["w2"].shape[1]
    SV = S * V
    SVp = _round_up(SV, 128)      # pad K so the MXU sees no lane remainder

    # Fold the embedding table into fc1:
    #   M[s*V + v, :] = emb[v, :] @ W1[s*E:(s+1)*E, :]
    m_fused = jnp.einsum("ve,seh->svh", emb, w1.reshape(S, E, H1))
    m_fused = m_fused.reshape(SV, H1)
    if SVp != SV:
        m_fused = jnp.pad(m_fused, ((0, SVp - SV), (0, 0)))
    m_fused = m_fused.astype(jnp.bfloat16)

    w2 = params["w2"].astype(jnp.bfloat16)                 # [512, 256]
    b1 = params["b1"].reshape(1, H1).astype(jnp.float32)
    b2 = params["b2"].reshape(1, H2).astype(jnp.float32)
    w3_row = params["w3"].reshape(1, H2).astype(jnp.float32)
    b3 = params["b3"].reshape(1, 1).astype(jnp.float32)

    TB = _choose_tb(B, block_b)
    B_pad = _round_up(B, TB)
    toks = tokens.astype(jnp.int32)
    if B_pad != B:
        toks = jnp.pad(toks, ((0, B_pad - B), (0, 0)))
    n_tiles = B_pad // TB

    cost = pl.CostEstimate(
        flops=2 * B_pad * (SVp * H1 + H1 * H2 + H2),
        transcendentals=0,
        bytes_accessed=(toks.size * 4 + m_fused.size * 2 + w2.size * 2
                        + (b1.size + b2.size + w3_row.size + b3.size) * 4
                        + B_pad * 4),
    )

    grid_spec = pltpu.PrefetchScalarGridSpec(
        num_scalar_prefetch=0,
        grid=(n_tiles,),
        in_specs=[
            pl.BlockSpec((TB, S), lambda i: (i, 0)),            # tokens
            pl.BlockSpec((SVp, H1), lambda i: (0, 0)),          # fused emb+fc1
            pl.BlockSpec((1, H1), lambda i: (0, 0)),            # b1
            pl.BlockSpec((H1, H2), lambda i: (0, 0)),           # w2
            pl.BlockSpec((1, H2), lambda i: (0, 0)),            # b2
            pl.BlockSpec((1, H2), lambda i: (0, 0)),            # w3 row
            pl.BlockSpec(memory_space=pltpu.MemorySpace.SMEM),  # b3 scalar
        ],
        out_specs=pl.BlockSpec((TB, 1), lambda i: (i, 0)),      # compact logits
    )

    out = pl.pallas_call(
        partial(_disc_kernel, n_vocab=V),
        out_shape=jax.ShapeDtypeStruct((B_pad, 1), jnp.float32),
        grid_spec=grid_spec,
        compiler_params=pltpu.CompilerParams(
            dimension_semantics=("parallel",)),
        cost_estimate=cost,
    )(toks, m_fused, b1, w2, b2, w3_row, b3)

    return out[:B]


def init_params(key, n_vocab, sequence_length, embed_dim):
    """Deterministic synthetic parameters matching the nn.Module shapes."""
    k_emb, k1, k2, k3 = jax.random.split(key, 4)
    in_dim = sequence_length * embed_dim

    def lin(k, fan_in, fan_out):
        kw, kb = jax.random.split(k)
        bound = 1.0 / (fan_in ** 0.5)
        w = jax.random.uniform(kw, (fan_in, fan_out), jnp.float32,
                               -bound, bound)
        b = jax.random.uniform(kb, (1, fan_out), jnp.float32, -bound, bound)
        return w, b

    w1, b1 = lin(k1, in_dim, 512)
    w2, b2 = lin(k2, 512, 256)
    w3, b3 = lin(k3, 256, 1)
    return {
        "embedding": jax.random.normal(k_emb, (n_vocab, embed_dim),
                                       jnp.float32),
        "w1": w1, "b1": b1,
        "w2": w2, "b2": b2,
        "w3": w3, "b3": b3,
    }


if __name__ == "__main__":
    n_vocab = 40
    sequence_length = 8
    embed_dim = 32
    batch = 2

    key = jax.random.PRNGKey(0)
    k_params, k_tokens = jax.random.split(key)

    params = init_params(k_params, n_vocab, sequence_length, embed_dim)
    tokens = jax.random.randint(k_tokens, (batch, sequence_length),
                                0, n_vocab, dtype=jnp.int32)

    logits = small_music_discriminator(tokens, params)
    logits = jax.block_until_ready(logits)

    # Pure-JAX f32 reference (unfused embedding + MLP, eval-mode dropout).
    x_ref = jnp.take(params["embedding"], tokens, axis=0).reshape(batch, -1)
    h = x_ref @ params["w1"] + params["b1"]
    h = jnp.where(h > 0, h, 0.2 * h)
    h = h @ params["w2"] + params["b2"]
    h = jnp.where(h > 0, h, 0.2 * h)
    ref = h @ params["w3"] + params["b3"]

    assert logits.shape == (batch, 1)
    # bf16 MXU operands (fused emb+fc1, fc2) -> loosened tolerance vs f32 ref.
    assert jnp.allclose(logits, ref, atol=2e-2, rtol=2e-2), (logits, ref)

    print("KERNEL_OK")
</pallas_src>

<mosaic_0001>
module attributes {stable_mosaic.version = 11 : i64} {
  func.func @_disc_kernel(%arg0: i32, %arg1: memref<8x8xi32, #tpu.memory_space<vmem>>, %arg2: memref<384x512xbf16, #tpu.memory_space<vmem>>, %arg3: memref<1x512xf32, #tpu.memory_space<vmem>>, %arg4: memref<512x256xbf16, #tpu.memory_space<vmem>>, %arg5: memref<1x256xf32, #tpu.memory_space<vmem>>, %arg6: memref<1x256xf32, #tpu.memory_space<vmem>>, %arg7: memref<1x1xf32, #tpu.memory_space<smem>>, %arg8: memref<8x1xf32, #tpu.memory_space<vmem>>) attributes {dimension_semantics = [#tpu.dimension_semantics<parallel>], iteration_bounds = array<i64: 1>, scalar_prefetch = 0 : i64, scratch_operands = 0 : i64, tpu.core_type = #tpu.core_type<tc>, window_params = [{transform_indices = @transform_0, window_bounds = array<i64: 8, 8>}, {pipeline_mode = #tpu.pipeline_mode<synchronous>, transform_indices = @transform_1, window_bounds = array<i64: 384, 512>}, {pipeline_mode = #tpu.pipeline_mode<synchronous>, transform_indices = @transform_2, window_bounds = array<i64: 1, 512>}, {pipeline_mode = #tpu.pipeline_mode<synchronous>, transform_indices = @transform_3, window_bounds = array<i64: 512, 256>}, {pipeline_mode = #tpu.pipeline_mode<synchronous>, transform_indices = @transform_4, window_bounds = array<i64: 1, 256>}, {pipeline_mode = #tpu.pipeline_mode<synchronous>, transform_indices = @transform_5, window_bounds = array<i64: 1, 256>}, {transform_indices = @transform_6, window_bounds = array<i64: 1, 1>}, {transform_indices = @transform_7, window_bounds = array<i64: 8, 1>}]} {
    %c0 = arith.constant 0 : index
    %c0_0 = arith.constant 0 : index
    %0 = vector.load %arg1[%c0, %c0_0] : memref<8x8xi32, #tpu.memory_space<vmem>>, vector<8x8xi32>
    %1 = tpu.iota {dimensions = array<i32: 1>} : vector<1x384xi32>
    %2 = vector.extract_strided_slice %0 {offsets = [0, 0], sizes = [8, 1], strides = [1, 1]} : vector<8x8xi32> to vector<8x1xi32>
    %3 = vector.broadcast %2 : vector<8x1xi32> to vector<8x384xi32>
    %4 = vector.broadcast %1 : vector<1x384xi32> to vector<8x384xi32>
    %5 = arith.cmpi eq, %3, %4 : vector<8x384xi32>
    %6 = vector.extract_strided_slice %0 {offsets = [0, 1], sizes = [8, 1], strides = [1, 1]} : vector<8x8xi32> to vector<8x1xi32>
    %c40_i32 = arith.constant 40 : i32
    %7 = vector.broadcast %c40_i32 : i32 to vector<1x384xi32>
    %8 = arith.subi %1, %7 : vector<1x384xi32>
    %9 = vector.broadcast %6 : vector<8x1xi32> to vector<8x384xi32>
    %10 = vector.broadcast %8 : vector<1x384xi32> to vector<8x384xi32>
    %11 = arith.cmpi eq, %9, %10 : vector<8x384xi32>
    %12 = arith.ori %5, %11 : vector<8x384xi1>
    %13 = vector.extract_strided_slice %0 {offsets = [0, 2], sizes = [8, 1], strides = [1, 1]} : vector<8x8xi32> to vector<8x1xi32>
    %c80_i32 = arith.constant 80 : i32
    %14 = vector.broadcast %c80_i32 : i32 to vector<1x384xi32>
    %15 = arith.subi %1, %14 : vector<1x384xi32>
    %16 = vector.broadcast %13 : vector<8x1xi32> to vector<8x384xi32>
    %17 = vector.broadcast %15 : vector<1x384xi32> to vector<8x384xi32>
    %18 = arith.cmpi eq, %16, %17 : vector<8x384xi32>
    %19 = arith.ori %12, %18 : vector<8x384xi1>
    %20 = vector.extract_strided_slice %0 {offsets = [0, 3], sizes = [8, 1], strides = [1, 1]} : vector<8x8xi32> to vector<8x1xi32>
    %c120_i32 = arith.constant 120 : i32
    %21 = vector.broadcast %c120_i32 : i32 to vector<1x384xi32>
    %22 = arith.subi %1, %21 : vector<1x384xi32>
    %23 = vector.broadcast %20 : vector<8x1xi32> to vector<8x384xi32>
    %24 = vector.broadcast %22 : vector<1x384xi32> to vector<8x384xi32>
    %25 = arith.cmpi eq, %23, %24 : vector<8x384xi32>
    %26 = arith.ori %19, %25 : vector<8x384xi1>
    %27 = vector.extract_strided_slice %0 {offsets = [0, 4], sizes = [8, 1], strides = [1, 1]} : vector<8x8xi32> to vector<8x1xi32>
    %c160_i32 = arith.constant 160 : i32
    %28 = vector.broadcast %c160_i32 : i32 to vector<1x384xi32>
    %29 = arith.subi %1, %28 : vector<1x384xi32>
    %30 = vector.broadcast %27 : vector<8x1xi32> to vector<8x384xi32>
    %31 = vector.broadcast %29 : vector<1x384xi32> to vector<8x384xi32>
    %32 = arith.cmpi eq, %30, %31 : vector<8x384xi32>
    %33 = arith.ori %26, %32 : vector<8x384xi1>
    %34 = vector.extract_strided_slice %0 {offsets = [0, 5], sizes = [8, 1], strides = [1, 1]} : vector<8x8xi32> to vector<8x1xi32>
    %c200_i32 = arith.constant 200 : i32
    %35 = vector.broadcast %c200_i32 : i32 to vector<1x384xi32>
    %36 = arith.subi %1, %35 : vector<1x384xi32>
    %37 = vector.broadcast %34 : vector<8x1xi32> to vector<8x384xi32>
    %38 = vector.broadcast %36 : vector<1x384xi32> to vector<8x384xi32>
    %39 = arith.cmpi eq, %37, %38 : vector<8x384xi32>
    %40 = arith.ori %33, %39 : vector<8x384xi1>
    %41 = vector.extract_strided_slice %0 {offsets = [0, 6], sizes = [8, 1], strides = [1, 1]} : vector<8x8xi32> to vector<8x1xi32>
    %c240_i32 = arith.constant 240 : i32
    %42 = vector.broadcast %c240_i32 : i32 to vector<1x384xi32>
    %43 = arith.subi %1, %42 : vector<1x384xi32>
    %44 = vector.broadcast %41 : vector<8x1xi32> to vector<8x384xi32>
    %45 = vector.broadcast %43 : vector<1x384xi32> to vector<8x384xi32>
    %46 = arith.cmpi eq, %44, %45 : vector<8x384xi32>
    %47 = arith.ori %40, %46 : vector<8x384xi1>
    %48 = vector.extract_strided_slice %0 {offsets = [0, 7], sizes = [8, 1], strides = [1, 1]} : vector<8x8xi32> to vector<8x1xi32>
    %c280_i32 = arith.constant 280 : i32
    %49 = vector.broadcast %c280_i32 : i32 to vector<1x384xi32>
    %50 = arith.subi %1, %49 : vector<1x384xi32>
    %51 = vector.broadcast %48 : vector<8x1xi32> to vector<8x384xi32>
    %52 = vector.broadcast %50 : vector<1x384xi32> to vector<8x384xi32>
    %53 = arith.cmpi eq, %51, %52 : vector<8x384xi32>
    %54 = arith.ori %47, %53 : vector<8x384xi1>
    %55 = arith.extui %54 : vector<8x384xi1> to vector<8x384xi32>
    %56 = arith.sitofp %55 : vector<8x384xi32> to vector<8x384xf32>
    %57 = arith.truncf %56 : vector<8x384xf32> to vector<8x384xbf16>
    %c0_1 = arith.constant 0 : index
    %c0_2 = arith.constant 0 : index
    %58 = vector.load %arg2[%c0_1, %c0_2] : memref<384x512xbf16, #tpu.memory_space<vmem>>, vector<384x512xbf16>
    %cst = arith.constant dense<0.000000e+00> : vector<8x512xf32>
    %59 = tpu.matmul %57, %58, %cst {dimension_numbers = #tpu.dot_dimension_numbers<[1], [0], [0], [1], [0, 0, 1, 1], [], []>} : vector<8x384xbf16>, vector<384x512xbf16>, vector<8x512xf32> -> vector<8x512xf32>
    %c0_3 = arith.constant 0 : index
    %c0_4 = arith.constant 0 : index
    %60 = vector.load %arg3[%c0_3, %c0_4] : memref<1x512xf32, #tpu.memory_space<vmem>>, vector<1x512xf32>
    %61 = vector.broadcast %60 : vector<1x512xf32> to vector<8x512xf32>
    %62 = arith.addf %59, %61 : vector<8x512xf32>
    %cst_5 = arith.constant 0.000000e+00 : f32
    %63 = vector.broadcast %cst_5 : f32 to vector<8x512xf32>
    %64 = arith.cmpf ogt, %62, %63 : vector<8x512xf32>
    %cst_6 = arith.constant 2.000000e-01 : f32
    %65 = vector.broadcast %cst_6 : f32 to vector<8x512xf32>
    %66 = arith.mulf %65, %62 : vector<8x512xf32>
    %67 = arith.select %64, %62, %66 : vector<8x512xi1>, vector<8x512xf32>
    %68 = arith.truncf %67 : vector<8x512xf32> to vector<8x512xbf16>
    %c0_7 = arith.constant 0 : index
    %c0_8 = arith.constant 0 : index
    %69 = vector.load %arg4[%c0_7, %c0_8] : memref<512x256xbf16, #tpu.memory_space<vmem>>, vector<512x256xbf16>
    %cst_9 = arith.constant dense<0.000000e+00> : vector<8x256xf32>
    %70 = tpu.matmul %68, %69, %cst_9 {dimension_numbers = #tpu.dot_dimension_numbers<[1], [0], [0], [1], [0, 0, 1, 1], [], []>} : vector<8x512xbf16>, vector<512x256xbf16>, vector<8x256xf32> -> vector<8x256xf32>
    %c0_10 = arith.constant 0 : index
    %c0_11 = arith.constant 0 : index
    %71 = vector.load %arg5[%c0_10, %c0_11] : memref<1x256xf32, #tpu.memory_space<vmem>>, vector<1x256xf32>
    %72 = vector.broadcast %71 : vector<1x256xf32> to vector<8x256xf32>
    %73 = arith.addf %70, %72 : vector<8x256xf32>
    %cst_12 = arith.constant 0.000000e+00 : f32
    %74 = vector.broadcast %cst_12 : f32 to vector<8x256xf32>
    %75 = arith.cmpf ogt, %73, %74 : vector<8x256xf32>
    %cst_13 = arith.constant 2.000000e-01 : f32
    %76 = vector.broadcast %cst_13 : f32 to vector<8x256xf32>
    %77 = arith.mulf %76, %73 : vector<8x256xf32>
    %78 = arith.select %75, %73, %77 : vector<8x256xi1>, vector<8x256xf32>
    %c0_14 = arith.constant 0 : index
    %c0_15 = arith.constant 0 : index
    %79 = vector.load %arg6[%c0_14, %c0_15] : memref<1x256xf32, #tpu.memory_space<vmem>>, vector<1x256xf32>
    %80 = vector.broadcast %79 : vector<1x256xf32> to vector<8x256xf32>
    %81 = arith.mulf %78, %80 : vector<8x256xf32>
    %cst_16 = arith.constant dense<0.000000e+00> : vector<8xf32>
    %82 = vector.multi_reduction <add>, %81, %cst_16 [1] : vector<8x256xf32> to vector<8xf32>
    %83 = vector.shape_cast %82 : vector<8xf32> to vector<8x1xf32>
    %c0_17 = arith.constant 0 : index
    %c0_18 = arith.constant 0 : index
    %84 = memref.load %arg7[%c0_17, %c0_18] : memref<1x1xf32, #tpu.memory_space<smem>>
    %85 = vector.broadcast %84 : f32 to vector<8x1xf32>
    %86 = arith.addf %83, %85 : vector<8x1xf32>
    %c0_19 = arith.constant 0 : index
    %c0_20 = arith.constant 0 : index
    %87 = vector.load %arg8[%c0_19, %c0_20] : memref<8x1xf32, #tpu.memory_space<vmem>>, vector<8x1xf32>
    tpu.vector_store %arg8[%c0_19, %c0_20], %86 {strides = array<i32>} : memref<8x1xf32, #tpu.memory_space<vmem>>, vector<8x1xf32>,
    return
  }
  func.func @transform_0(%arg0: i32) -> (i32, i32) {
    %c0_i32 = arith.constant 0 : i32
    %c0_i32_0 = arith.constant 0 : i32
    return %arg0, %c0_i32 : i32, i32
  }
  func.func @transform_1(%arg0: i32) -> (i32, i32) {
    %c0_i32 = arith.constant 0 : i32
    %c0_i32_0 = arith.constant 0 : i32
    %c0_i32_1 = arith.constant 0 : i32
    return %c0_i32, %c0_i32_0 : i32, i32
  }
  func.func @transform_2(%arg0: i32) -> (i32, i32) {
    %c0_i32 = arith.constant 0 : i32
    %c0_i32_0 = arith.constant 0 : i32
    %c0_i32_1 = arith.constant 0 : i32
    return %c0_i32, %c0_i32_0 : i32, i32
  }
  func.func @transform_3(%arg0: i32) -> (i32, i32) {
    %c0_i32 = arith.constant 0 : i32
    %c0_i32_0 = arith.constant 0 : i32
    %c0_i32_1 = arith.constant 0 : i32
    return %c0_i32, %c0_i32_0 : i32, i32
  }
  func.func @transform_4(%arg0: i32) -> (i32, i32) {
    %c0_i32 = arith.constant 0 : i32
    %c0_i32_0 = arith.constant 0 : i32
    %c0_i32_1 = arith.constant 0 : i32
    return %c0_i32, %c0_i32_0 : i32, i32
  }
  func.func @transform_5(%arg0: i32) -> (i32, i32) {
    %c0_i32 = arith.constant 0 : i32
    %c0_i32_0 = arith.constant 0 : i32
    %c0_i32_1 = arith.constant 0 : i32
    return %c0_i32, %c0_i32_0 : i32, i32
  }
  func.func @transform_6(%arg0: i32) -> (i32, i32) {
    %c0_i32 = arith.constant 0 : i32
    %c0_i32_0 = arith.constant 0 : i32
    %c0_i32_1 = arith.constant 0 : i32
    return %c0_i32, %c0_i32_0 : i32, i32
  }
  func.func @transform_7(%arg0: i32) -> (i32, i32) {
    %c0_i32 = arith.constant 0 : i32
    %c0_i32_0 = arith.constant 0 : i32
    return %arg0, %c0_i32 : i32, i32
  }
}

</mosaic_0001>

<llo_original>
// kernel: tpu_custom_call.1
$region0: #{tpu_custom_call.1}
  #allocation0 [shape = 'u32[]', space=smem, size = 0x4, offset = 0x4, fixed_abs, tag = 'smem constant byte address 0x4 - core index']
  #allocation1 [shape = 'u32[144,128]{1,0:T(1,128)}', space=vmem, size = 0x12000, scoped, tag = 'internal scratch']
  #allocation2 [shape = 'f32[1,1]{1,0:T(1,128)S(6)}', space=smem, size = 0x200, scoped, tag = 'scoped memory for tpu_custom_call.1']
  %s0 = inlined_call_operand.hbm [shape: s32[8,8], index: 0, kind: input, shape index: {}]
  %s1 = inlined_call_operand.hbm [shape: bf16[384,512], index: 1, kind: input, shape index: {}]
  %s2 = inlined_call_operand.vmem [shape: f32[1,512], index: 2, kind: input, shape index: {}]
  %s3 = inlined_call_operand.hbm [shape: bf16[512,256], index: 3, kind: input, shape index: {}]
  %s4 = inlined_call_operand.vmem [shape: f32[1,256], index: 4, kind: input, shape index: {}]
  %s5 = inlined_call_operand.vmem [shape: f32[1,256], index: 5, kind: input, shape index: {}]
  %s6 = inlined_call_operand.<no memory space> [shape: f32[1,1], index: 6, kind: input, shape index: {}]
  %s7 = inlined_call_operand.vmem [shape: f32[8,1], index: 7, kind: output, shape index: {}]
  %s8 = sld [smem:[#allocation0]]
  $region50: #{tpu_custom_call.1} parent=0
    _
  %s10 = ssub.s32 1, %s8
  %s11 = scalar_select 0, %s10, %s8
  %12 = sst [smem:[#allocation2]] %s6
  $region1: #{tpu_custom_call.1} parent=0
    #allocation3 [shape = 'u8[4096]{0}', space=vmem, size = 0x1000, scoped, tag = 'input window, operand 0, single buffered']
    #allocation4 [shape = 's32[1]{0}', space=sflag, size = 0x4, scoped, tag = 'scoped memory for tpu_custom_call.1']
    #allocation5 [shape = 'u8[393216]{0}', space=vmem, size = 0x60000, scoped, tag = 'input window, operand 1, single buffered']
    #allocation6 [shape = 's32[1]{0}', space=sflag, size = 0x4, scoped, tag = 'scoped memory for tpu_custom_call.1']
    #allocation7 [shape = 'u8[262144]{0}', space=vmem, size = 0x40000, scoped, tag = 'input window, operand 3, single buffered']
    %13 = vsyncpa [#allocation4], 0
    %14 = vsyncpa [#allocation6], 0
    // Predicated region
    $region2: #{tpu_custom_call.1} parent=1 // pred_check
      _
    $region3: #{tpu_custom_call.1} parent=1 // pred_check_branch
      %16 = sbr.rel (0) target = $region5
    $region4: #{tpu_custom_call.1} parent=1 // pred_region
      %s18 = ssub.s32 128, 128
      %19 = vsyncadd [#allocation4], %s18
      %s21 = sshll.u32 [#allocation3], 4
      %s22 = int_to_ptr.vmem [resolvable:$true] %s21
      %24 = dma.hbm_to_vmem [thread:$0]  %s0, 128, %s22, [#allocation4]
    $region5: #{tpu_custom_call.1} parent=1 // pred_fallthru
      _
    // Predicated region
    $region6: #{tpu_custom_call.1} parent=1 // pred_check
      _
    $region7: #{tpu_custom_call.1} parent=1 // pred_check_branch
      %26 = sbr.rel (0) target = $region9
    $region8: #{tpu_custom_call.1} parent=1 // pred_region
      %s28 = ssub.s32 12288, 12288
      %29 = vsyncadd [#allocation6], %s28
      %s30 = sshll.u32 [#allocation5], 4
      %s31 = int_to_ptr.vmem [resolvable:$true] %s30
      %36 = dma.hbm_to_vmem [thread:$0]  %s1, 12288, %s31, [#allocation6], 256, 256, 16
    $region9: #{tpu_custom_call.1} parent=1 // pred_fallthru
      _
    // Predicated region
    $region10: #{tpu_custom_call.1} parent=1 // pred_check
      _
    $region11: #{tpu_custom_call.1} parent=1 // pred_check_branch
      %38 = sbr.rel (0) target = $region13
    $region12: #{tpu_custom_call.1} parent=1 // pred_region
      _
    $region13: #{tpu_custom_call.1} parent=1 // pred_fallthru
      _
    // Predicated region
    $region14: #{tpu_custom_call.1} parent=1 // pred_check
      _
    $region15: #{tpu_custom_call.1} parent=1 // pred_check_branch
      %40 = sbr.rel (0) target = $region17
    $region16: #{tpu_custom_call.1} parent=1 // pred_region
      %s42 = ssub.s32 8192, 8192
      %43 = vsyncadd [#allocation6], %s42
      %s44 = sshll.u32 [#allocation7], 4
      %s45 = int_to_ptr.vmem [resolvable:$true] %s44
      %50 = dma.hbm_to_vmem [thread:$0]  %s3, 8192, %s45, [#allocation6], 128, 128, 8
    $region17: #{tpu_custom_call.1} parent=1 // pred_fallthru
      _
    // Predicated region
    $region18: #{tpu_custom_call.1} parent=1 // pred_check
      _
    $region19: #{tpu_custom_call.1} parent=1 // pred_check_branch
      %52 = sbr.rel (0) target = $region21
    $region20: #{tpu_custom_call.1} parent=1 // pred_region
      _
    $region21: #{tpu_custom_call.1} parent=1 // pred_fallthru
      _
    // Predicated region
    $region22: #{tpu_custom_call.1} parent=1 // pred_check
      _
    $region23: #{tpu_custom_call.1} parent=1 // pred_check_branch
      %54 = sbr.rel (0) target = $region25
    $region24: #{tpu_custom_call.1} parent=1 // pred_region
      _
    $region25: #{tpu_custom_call.1} parent=1 // pred_fallthru
      _
    // Predicated region
    $region26: #{tpu_custom_call.1} parent=1 // pred_check
      _
    $region27: #{tpu_custom_call.1} parent=1 // pred_check_branch
      %56 = sbr.rel (0) target = $region29
    $region28: #{tpu_custom_call.1} parent=1 // pred_region
      _
    $region29: #{tpu_custom_call.1} parent=1 // pred_fallthru
      _
    // Predicated region
    $region30: #{tpu_custom_call.1} parent=1 // pred_check
      _
    $region31: #{tpu_custom_call.1} parent=1 // pred_check_branch
      %58 = sbr.rel (0) target = $region33
    $region32: #{tpu_custom_call.1} parent=1 // pred_region
      %59 = dma.done [#allocation4], 128
    $region33: #{tpu_custom_call.1} parent=1 // pred_fallthru
      _
    // Predicated region
    $region34: #{tpu_custom_call.1} parent=1 // pred_check
      _
    $region35: #{tpu_custom_call.1} parent=1 // pred_check_branch
      %61 = sbr.rel (0) target = $region37
    $region36: #{tpu_custom_call.1} parent=1 // pred_region
      %62 = dma.done [#allocation6], 12288
    $region37: #{tpu_custom_call.1} parent=1 // pred_fallthru
      _
    // Predicated region
    $region38: #{tpu_custom_call.1} parent=1 // pred_check
      _
    $region39: #{tpu_custom_call.1} parent=1 // pred_check_branch
      %64 = sbr.rel (0) target = $region41
    $region40: #{tpu_custom_call.1} parent=1 // pred_region
      %65 = dma.done [#allocation6], 8192
    $region41: #{tpu_custom_call.1} parent=1 // pred_fallthru
      _
    %v67 = vld [vmem:[#allocation3] sm:$0xff]
    %v68 = vlaneseq
    %v69 = vand.u32 %v68, 127
    %v70 = vadd.s32 %v69, 128
    %v71 = vadd.s32 %v69, 256
    %72 = vset.pattern.permute.xlu0 0
    %73 = vperm.xlu0 %72, %v67
    %v74 = vpop.permute.xlu0 %73
    %vm75 = vcmp.eq.s32.totalorder %v74, %v69
    %vm76 = vcmp.eq.s32.totalorder %v74, %v70
    %vm77 = vcmp.eq.s32.totalorder %v74, %v71
    %v78 = vsub.s32 %v69, 40
    %v79 = vsub.s32 %v70, 40
    %v80 = vsub.s32 %v71, 40
    %81 = vset.pattern.permute.xlu0 1
    %82 = vperm.xlu0 %81, %v67
    %v83 = vpop.permute.xlu0 %82
    %vm84 = vcmp.eq.s32.totalorder %v83, %v78
    %vm85 = vcmp.eq.s32.totalorder %v83, %v79
    %vm86 = vcmp.eq.s32.totalorder %v83, %v80
    %vm87 = vmor %vm75, %vm84
    %vm88 = vmor %vm76, %vm85
    %vm89 = vmor %vm77, %vm86
    %v90 = vsub.s32 %v69, 80
    %v91 = vsub.s32 %v70, 80
    %v92 = vsub.s32 %v71, 80
    %93 = vset.pattern.permute.xlu0 2
    %94 = vperm.xlu0 %93, %v67
    %v95 = vpop.permute.xlu0 %94
    %vm96 = vcmp.eq.s32.totalorder %v95, %v90
    %vm97 = vcmp.eq.s32.totalorder %v95, %v91
    %vm98 = vcmp.eq.s32.totalorder %v95, %v92
    %vm99 = vmor %vm87, %vm96
    %vm100 = vmor %vm88, %vm97
    %vm101 = vmor %vm89, %vm98
    %v102 = vsub.s32 %v69, 120
    %v103 = vsub.s32 %v70, 120
    %v104 = vsub.s32 %v71, 120
    %105 = vset.pattern.permute.xlu0 3
    %106 = vperm.xlu0 %105, %v67
    %v107 = vpop.permute.xlu0 %106
    %vm108 = vcmp.eq.s32.totalorder %v107, %v102
    %vm109 = vcmp.eq.s32.totalorder %v107, %v103
    %vm110 = vcmp.eq.s32.totalorder %v107, %v104
    %vm111 = vmor %vm99, %vm108
    %vm112 = vmor %vm100, %vm109
    %vm113 = vmor %vm101, %vm110
    %v114 = vsub.s32 %v69, 160
    %v115 = vsub.s32 %v70, 160
    %v116 = vsub.s32 %v71, 160
    %117 = vset.pattern.permute.xlu0 4
    %118 = vperm.xlu0 %117, %v67
    %v119 = vpop.permute.xlu0 %118
    %vm120 = vcmp.eq.s32.totalorder %v119, %v114
    %vm121 = vcmp.eq.s32.totalorder %v119, %v115
    %vm122 = vcmp.eq.s32.totalorder %v119, %v116
    %vm123 = vmor %vm111, %vm120
    %vm124 = vmor %vm112, %vm121
    %vm125 = vmor %vm113, %vm122
    %v126 = vsub.s32 %v69, 200
    %v127 = vsub.s32 %v70, 200
    %v128 = vsub.s32 %v71, 200
    %129 = vset.pattern.permute.xlu0 5
    %130 = vperm.xlu0 %129, %v67
    %v131 = vpop.permute.xlu0 %130
    %vm132 = vcmp.eq.s32.totalorder %v131, %v126
    %vm133 = vcmp.eq.s32.totalorder %v131, %v127
    %vm134 = vcmp.eq.s32.totalorder %v131, %v128
    %vm135 = vmor %vm123, %vm132
    %vm136 = vmor %vm124, %vm133
    %vm137 = vmor %vm125, %vm134
    %v138 = vsub.s32 %v69, 240
    %v139 = vsub.s32 %v70, 240
    %v140 = vsub.s32 %v71, 240
    %141 = vset.pattern.permute.xlu0 6
    %142 = vperm.xlu0 %141, %v67
    %v143 = vpop.permute.xlu0 %142
    %vm144 = vcmp.eq.s32.totalorder %v143, %v138
    %vm145 = vcmp.eq.s32.totalorder %v143, %v139
    %vm146 = vcmp.eq.s32.totalorder %v143, %v140
    %vm147 = vmor %vm135, %vm144
    %vm148 = vmor %vm136, %vm145
    %vm149 = vmor %vm137, %vm146
    %v150 = vsub.s32 %v69, 280
    %v151 = vsub.s32 %v70, 280
    %v152 = vsub.s32 %v71, 280
    %153 = vset.pattern.permute.xlu0 7
    %154 = vperm.xlu0 %153, %v67
    %v155 = vpop.permute.xlu0 %154
    %vm156 = vcmp.eq.s32.totalorder %v155, %v150
    %vm157 = vcmp.eq.s32.totalorder %v155, %v151
    %vm158 = vcmp.eq.s32.totalorder %v155, %v152
    %vm159 = vmor %vm147, %vm156
    %vm160 = vmor %vm148, %vm157
    %vm161 = vmor %vm149, %vm158
    %v162 = vsel %vm159, 1, 0
    %v163 = vsel %vm160, 1, 0
    %v164 = vsel %vm161, 1, 0
    %v165 = vcvt.s32.f32 %v162
    %v166 = vcvt.s32.f32 %v163
    %v167 = vcvt.s32.f32 %v164
    %v168 = vpack.c.bf16 %v165, %v165
    %v169 = vpack.c.bf16 %v166, %v166
    %v170 = vpack.c.bf16 %v167, %v167
    %v171 = vld [vmem:[#allocation5] sm:$0xff]
    %v172 = vld [vmem:[#allocation5 + $0x8] sm:$0xff]
    %v173 = vld [vmem:[#allocation5 + $0x10] sm:$0xff]
    %v174 = vld [vmem:[#allocation5 + $0x18] sm:$0xff]
    %v175 = vld [vmem:[#allocation5 + $0x20] sm:$0xff]
    %v176 = vld [vmem:[#allocation5 + $0x28] sm:$0xff]
    %v177 = vld [vmem:[#allocation5 + $0x30] sm:$0xff]
    %v178 = vld [vmem:[#allocation5 + $0x38] sm:$0xff]
    %v179 = vld [vmem:[#allocation5 + $0x40] sm:$0xff]
    %v180 = vld [vmem:[#allocation5 + $0x48] sm:$0xff]
    %v181 = vld [vmem:[#allocation5 + $0x50] sm:$0xff]
    %v182 = vld [vmem:[#allocation5 + $0x58] sm:$0xff]
    %v183 = vld [vmem:[#allocation5 + $0x60] sm:$0xff]
    %v184 = vld [vmem:[#allocation5 + $0x68] sm:$0xff]
    %v185 = vld [vmem:[#allocation5 + $0x70] sm:$0xff]
    %v186 = vld [vmem:[#allocation5 + $0x78] sm:$0xff]
    %v187 = vld [vmem:[#allocation5 + $0x80] sm:$0xff]
    %v188 = vld [vmem:[#allocation5 + $0x88] sm:$0xff]
    %v189 = vld [vmem:[#allocation5 + $0x90] sm:$0xff]
    %v190 = vld [vmem:[#allocation5 + $0x98] sm:$0xff]
    %v191 = vld [vmem:[#allocation5 + $0xa0] sm:$0xff]
    %v192 = vld [vmem:[#allocation5 + $0xa8] sm:$0xff]
    %v193 = vld [vmem:[#allocation5 + $0xb0] sm:$0xff]
    %v194 = vld [vmem:[#allocation5 + $0xb8] sm:$0xff]
    %v195 = vld [vmem:[#allocation5 + $0xc0] sm:$0xff]
    %v196 = vld [vmem:[#allocation5 + $0xc8] sm:$0xff]
    %v197 = vld [vmem:[#allocation5 + $0xd0] sm:$0xff]
    %v198 = vld [vmem:[#allocation5 + $0xd8] sm:$0xff]
    %v199 = vld [vmem:[#allocation5 + $0xe0] sm:$0xff]
    %v200 = vld [vmem:[#allocation5 + $0xe8] sm:$0xff]
    %v201 = vld [vmem:[#allocation5 + $0xf0] sm:$0xff]
    %v202 = vld [vmem:[#allocation5 + $0xf8] sm:$0xff]
    %v203 = vld [vmem:[#allocation5 + $0x100] sm:$0xff]
    %v204 = vld [vmem:[#allocation5 + $0x108] sm:$0xff]
    %v205 = vld [vmem:[#allocation5 + $0x110] sm:$0xff]
    %v206 = vld [vmem:[#allocation5 + $0x118] sm:$0xff]
    %v207 = vld [vmem:[#allocation5 + $0x120] sm:$0xff]
    %v208 = vld [vmem:[#allocation5 + $0x128] sm:$0xff]
    %v209 = vld [vmem:[#allocation5 + $0x130] sm:$0xff]
    %v210 = vld [vmem:[#allocation5 + $0x138] sm:$0xff]
    %v211 = vld [vmem:[#allocation5 + $0x140] sm:$0xff]
    %v212 = vld [vmem:[#allocation5 + $0x148] sm:$0xff]
    %v213 = vld [vmem:[#allocation5 + $0x150] sm:$0xff]
    %v214 = vld [vmem:[#allocation5 + $0x158] sm:$0xff]
    %v215 = vld [vmem:[#allocation5 + $0x160] sm:$0xff]
    %v216 = vld [vmem:[#allocation5 + $0x168] sm:$0xff]
    %v217 = vld [vmem:[#allocation5 + $0x170] sm:$0xff]
    %v218 = vld [vmem:[#allocation5 + $0x178] sm:$0xff]
    %v219 = vld [vmem:[#allocation5 + $0x180] sm:$0xff]
    %v220 = vld [vmem:[#allocation5 + $0x188] sm:$0xff]
    %v221 = vld [vmem:[#allocation5 + $0x190] sm:$0xff]
    %v222 = vld [vmem:[#allocation5 + $0x198] sm:$0xff]
    %v223 = vld [vmem:[#allocation5 + $0x1a0] sm:$0xff]
    %v224 = vld [vmem:[#allocation5 + $0x1a8] sm:$0xff]
    %v225 = vld [vmem:[#allocation5 + $0x1b0] sm:$0xff]
    %v226 = vld [vmem:[#allocation5 + $0x1b8] sm:$0xff]
    %v227 = vld [vmem:[#allocation5 + $0x1c0] sm:$0xff]
    %v228 = vld [vmem:[#allocation5 + $0x1c8] sm:$0xff]
    %v229 = vld [vmem:[#allocation5 + $0x1d0] sm:$0xff]
    %v230 = vld [vmem:[#allocation5 + $0x1d8] sm:$0xff]
    %v231 = vld [vmem:[#allocation5 + $0x1e0] sm:$0xff]
    %v232 = vld [vmem:[#allocation5 + $0x1e8] sm:$0xff]
    %v233 = vld [vmem:[#allocation5 + $0x1f0] sm:$0xff]
    %v234 = vld [vmem:[#allocation5 + $0x1f8] sm:$0xff]
    %v235 = vld [vmem:[#allocation5 + $0x200] sm:$0xff]
    %v236 = vld [vmem:[#allocation5 + $0x208] sm:$0xff]
    %v237 = vld [vmem:[#allocation5 + $0x210] sm:$0xff]
    %v238 = vld [vmem:[#allocation5 + $0x218] sm:$0xff]
    %v239 = vld [vmem:[#allocation5 + $0x220] sm:$0xff]
    %v240 = vld [vmem:[#allocation5 + $0x228] sm:$0xff]
    %v241 = vld [vmem:[#allocation5 + $0x230] sm:$0xff]
    %v242 = vld [vmem:[#allocation5 + $0x238] sm:$0xff]
    %v243 = vld [vmem:[#allocation5 + $0x240] sm:$0xff]
    %v244 = vld [vmem:[#allocation5 + $0x248] sm:$0xff]
    %v245 = vld [vmem:[#allocation5 + $0x250] sm:$0xff]
    %v246 = vld [vmem:[#allocation5 + $0x258] sm:$0xff]
    %v247 = vld [vmem:[#allocation5 + $0x260] sm:$0xff]
    %v248 = vld [vmem:[#allocation5 + $0x268] sm:$0xff]
    %v249 = vld [vmem:[#allocation5 + $0x270] sm:$0xff]
    %v250 = vld [vmem:[#allocation5 + $0x278] sm:$0xff]
    %v251 = vld [vmem:[#allocation5 + $0x280] sm:$0xff]
    %v252 = vld [vmem:[#allocation5 + $0x288] sm:$0xff]
    %v253 = vld [vmem:[#allocation5 + $0x290] sm:$0xff]
    %v254 = vld [vmem:[#allocation5 + $0x298] sm:$0xff]
    %v255 = vld [vmem:[#allocation5 + $0x2a0] sm:$0xff]
    %v256 = vld [vmem:[#allocation5 + $0x2a8] sm:$0xff]
    %v257 = vld [vmem:[#allocation5 + $0x2b0] sm:$0xff]
    %v258 = vld [vmem:[#allocation5 + $0x2b8] sm:$0xff]
    %v259 = vld [vmem:[#allocation5 + $0x2c0] sm:$0xff]
    %v260 = vld [vmem:[#allocation5 + $0x2c8] sm:$0xff]
    %v261 = vld [vmem:[#allocation5 + $0x2d0] sm:$0xff]
    %v262 = vld [vmem:[#allocation5 + $0x2d8] sm:$0xff]
    %v263 = vld [vmem:[#allocation5 + $0x2e0] sm:$0xff]
    %v264 = vld [vmem:[#allocation5 + $0x2e8] sm:$0xff]
    %v265 = vld [vmem:[#allocation5 + $0x2f0] sm:$0xff]
    %v266 = vld [vmem:[#allocation5 + $0x2f8] sm:$0xff]
    %v267 = vld [vmem:[%s2] sm:$0xf]
    %v269 = vlaneseq
    %v270 = vshrl.u32 %v269, 7
    %v271 = vsub.s32 0, %v270
    %v272 = vrot.slane %v267, %v271
    %v273 = vlaneseq
    %v274 = vshrl.u32 %v273, 7
    %v275 = vsub.s32 1, %v274
    %v276 = vrot.slane %v267, %v275
    %v277 = vlaneseq
    %v278 = vshrl.u32 %v277, 7
    %v279 = vsub.s32 2, %v278
    %v280 = vrot.slane %v267, %v279
    %v281 = vlaneseq
    %v282 = vshrl.u32 %v281, 7
    %v283 = vsub.s32 3, %v282
    %v284 = vrot.slane %v267, %v283
    %v385 = vunpack.c.l.b16 %v171
    %v386 = vunpack.c.h.b16 %v171
    %v387 = vunpack.c.l.b16 %v172
    %v388 = vunpack.c.h.b16 %v172
    %v389 = vunpack.c.l.b16 %v173
    %v390 = vunpack.c.h.b16 %v173
    %v391 = vunpack.c.l.b16 %v174
    %v392 = vunpack.c.h.b16 %v174
    %v393 = vunpack.c.l.b16 %v175
    %v394 = vunpack.c.h.b16 %v175
    %v395 = vunpack.c.l.b16 %v176
    %v396 = vunpack.c.h.b16 %v176
    %v397 = vunpack.c.l.b16 %v177
    %v398 = vunpack.c.h.b16 %v177
    %v399 = vunpack.c.l.b16 %v178
    %v400 = vunpack.c.h.b16 %v178
    %v401 = vunpack.c.l.b16 %v179
    %v402 = vunpack.c.h.b16 %v179
    %v403 = vunpack.c.l.b16 %v180
    %v404 = vunpack.c.h.b16 %v180
    %v405 = vunpack.c.l.b16 %v181
    %v406 = vunpack.c.h.b16 %v181
    %v407 = vunpack.c.l.b16 %v182
    %v408 = vunpack.c.h.b16 %v182
    %v409 = vunpack.c.l.b16 %v183
    %v410 = vunpack.c.h.b16 %v183
    %v411 = vunpack.c.l.b16 %v184
    %v412 = vunpack.c.h.b16 %v184
    %v413 = vunpack.c.l.b16 %v185
    %v414 = vunpack.c.h.b16 %v185
    %v415 = vunpack.c.l.b16 %v186
    %v416 = vunpack.c.h.b16 %v186
    %v417 = vunpack.c.l.b16 %v187
    %v418 = vunpack.c.h.b16 %v187
    %v419 = vunpack.c.l.b16 %v188
    %v420 = vunpack.c.h.b16 %v188
    %v421 = vunpack.c.l.b16 %v189
    %v422 = vunpack.c.h.b16 %v189
    %v423 = vunpack.c.l.b16 %v190
    %v424 = vunpack.c.h.b16 %v190
    %v425 = vunpack.c.l.b16 %v191
    %v426 = vunpack.c.h.b16 %v191
    %v427 = vunpack.c.l.b16 %v192
    %v428 = vunpack.c.h.b16 %v192
    %v429 = vunpack.c.l.b16 %v193
    %v430 = vunpack.c.h.b16 %v193
    %v431 = vunpack.c.l.b16 %v194
    %v432 = vunpack.c.h.b16 %v194
    %v433 = vunpack.c.l.b16 %v195
    %v434 = vunpack.c.h.b16 %v195
    %v435 = vunpack.c.l.b16 %v196
    %v436 = vunpack.c.h.b16 %v196
    %v437 = vunpack.c.l.b16 %v197
    %v438 = vunpack.c.h.b16 %v197
    %v439 = vunpack.c.l.b16 %v198
    %v440 = vunpack.c.h.b16 %v198
    %v441 = vunpack.c.l.b16 %v199
    %v442 = vunpack.c.h.b16 %v199
    %v443 = vunpack.c.l.b16 %v200
    %v444 = vunpack.c.h.b16 %v200
    %v445 = vunpack.c.l.b16 %v201
    %v446 = vunpack.c.h.b16 %v201
    %v447 = vunpack.c.l.b16 %v202
    %v448 = vunpack.c.h.b16 %v202
    %v449 = vunpack.c.l.b16 %v203
    %v450 = vunpack.c.h.b16 %v203
    %v451 = vunpack.c.l.b16 %v204
    %v452 = vunpack.c.h.b16 %v204
    %v453 = vunpack.c.l.b16 %v205
    %v454 = vunpack.c.h.b16 %v205
    %v455 = vunpack.c.l.b16 %v206
    %v456 = vunpack.c.h.b16 %v206
    %v457 = vunpack.c.l.b16 %v207
    %v458 = vunpack.c.h.b16 %v207
    %v459 = vunpack.c.l.b16 %v208
    %v460 = vunpack.c.h.b16 %v208
    %v461 = vunpack.c.l.b16 %v209
    %v462 = vunpack.c.h.b16 %v209
    %v463 = vunpack.c.l.b16 %v210
    %v464 = vunpack.c.h.b16 %v210
    %v465 = vunpack.c.l.b16 %v211
    %v466 = vunpack.c.h.b16 %v211
    %v467 = vunpack.c.l.b16 %v212
    %v468 = vunpack.c.h.b16 %v212
    %v469 = vunpack.c.l.b16 %v213
    %v470 = vunpack.c.h.b16 %v213
    %v471 = vunpack.c.l.b16 %v214
    %v472 = vunpack.c.h.b16 %v214
    %v473 = vunpack.c.l.b16 %v215
    %v474 = vunpack.c.h.b16 %v215
    %v475 = vunpack.c.l.b16 %v216
    %v476 = vunpack.c.h.b16 %v216
    %v477 = vunpack.c.l.b16 %v217
    %v478 = vunpack.c.h.b16 %v217
    %v479 = vunpack.c.l.b16 %v218
    %v480 = vunpack.c.h.b16 %v218
    %v481 = vunpack.c.l.b16 %v219
    %v482 = vunpack.c.h.b16 %v219
    %v483 = vunpack.c.l.b16 %v220
    %v484 = vunpack.c.h.b16 %v220
    %v485 = vunpack.c.l.b16 %v221
    %v486 = vunpack.c.h.b16 %v221
    %v487 = vunpack.c.l.b16 %v222
    %v488 = vunpack.c.h.b16 %v222
    %v489 = vunpack.c.l.b16 %v223
    %v490 = vunpack.c.h.b16 %v223
    %v491 = vunpack.c.l.b16 %v224
    %v492 = vunpack.c.h.b16 %v224
    %v493 = vunpack.c.l.b16 %v225
    %v494 = vunpack.c.h.b16 %v225
    %v495 = vunpack.c.l.b16 %v226
    %v496 = vunpack.c.h.b16 %v226
    %v497 = vunpack.c.l.b16 %v227
    %v498 = vunpack.c.h.b16 %v227
    %v499 = vunpack.c.l.b16 %v228
    %v500 = vunpack.c.h.b16 %v228
    %v501 = vunpack.c.l.b16 %v229
    %v502 = vunpack.c.h.b16 %v229
    %v503 = vunpack.c.l.b16 %v230
    %v504 = vunpack.c.h.b16 %v230
    %v505 = vunpack.c.l.b16 %v231
    %v506 = vunpack.c.h.b16 %v231
    %v507 = vunpack.c.l.b16 %v232
    %v508 = vunpack.c.h.b16 %v232
    %v509 = vunpack.c.l.b16 %v233
    %v510 = vunpack.c.h.b16 %v233
    %v511 = vunpack.c.l.b16 %v234
    %v512 = vunpack.c.h.b16 %v234
    %v513 = vunpack.c.l.b16 %v235
    %v514 = vunpack.c.h.b16 %v235
    %v515 = vunpack.c.l.b16 %v236
    %v516 = vunpack.c.h.b16 %v236
    %v517 = vunpack.c.l.b16 %v237
    %v518 = vunpack.c.h.b16 %v237
    %v519 = vunpack.c.l.b16 %v238
    %v520 = vunpack.c.h.b16 %v238
    %v521 = vunpack.c.l.b16 %v239
    %v522 = vunpack.c.h.b16 %v239
    %v523 = vunpack.c.l.b16 %v240
    %v524 = vunpack.c.h.b16 %v240
    %v525 = vunpack.c.l.b16 %v241
    %v526 = vunpack.c.h.b16 %v241
    %v527 = vunpack.c.l.b16 %v242
    %v528 = vunpack.c.h.b16 %v242
    %v529 = vunpack.c.l.b16 %v243
    %v530 = vunpack.c.h.b16 %v243
    %v531 = vunpack.c.l.b16 %v244
    %v532 = vunpack.c.h.b16 %v244
    %v533 = vunpack.c.l.b16 %v245
    %v534 = vunpack.c.h.b16 %v245
    %v535 = vunpack.c.l.b16 %v246
    %v536 = vunpack.c.h.b16 %v246
    %v537 = vunpack.c.l.b16 %v247
    %v538 = vunpack.c.h.b16 %v247
    %v539 = vunpack.c.l.b16 %v248
    %v540 = vunpack.c.h.b16 %v248
    %v541 = vunpack.c.l.b16 %v249
    %v542 = vunpack.c.h.b16 %v249
    %v543 = vunpack.c.l.b16 %v250
    %v544 = vunpack.c.h.b16 %v250
    %v545 = vunpack.c.l.b16 %v251
    %v546 = vunpack.c.h.b16 %v251
    %v547 = vunpack.c.l.b16 %v252
    %v548 = vunpack.c.h.b16 %v252
    %v549 = vunpack.c.l.b16 %v253
    %v550 = vunpack.c.h.b16 %v253
    %v551 = vunpack.c.l.b16 %v254
    %v552 = vunpack.c.h.b16 %v254
    %v553 = vunpack.c.l.b16 %v255
    %v554 = vunpack.c.h.b16 %v255
    %v555 = vunpack.c.l.b16 %v256
    %v556 = vunpack.c.h.b16 %v256
    %v557 = vunpack.c.l.b16 %v257
    %v558 = vunpack.c.h.b16 %v257
    %v559 = vunpack.c.l.b16 %v258
    %v560 = vunpack.c.h.b16 %v258
    %v561 = vunpack.c.l.b16 %v259
    %v562 = vunpack.c.h.b16 %v259
    %v563 = vunpack.c.l.b16 %v260
    %v564 = vunpack.c.h.b16 %v260
    %v565 = vunpack.c.l.b16 %v261
    %v566 = vunpack.c.h.b16 %v261
    %v567 = vunpack.c.l.b16 %v262
    %v568 = vunpack.c.h.b16 %v262
    %v569 = vunpack.c.l.b16 %v263
    %v570 = vunpack.c.h.b16 %v263
    %v571 = vunpack.c.l.b16 %v264
    %v572 = vunpack.c.h.b16 %v264
    %v573 = vunpack.c.l.b16 %v265
    %v574 = vunpack.c.h.b16 %v265
    %v575 = vunpack.c.l.b16 %v266
    %v576 = vunpack.c.h.b16 %v266
    %v577 = vpack.c.b16 %v389, %v385
    %v578 = vpack.c.b16 %v390, %v386
    %v579 = vpack.c.b16 %v391, %v387
    %v580 = vpack.c.b16 %v392, %v388
    %v581 = vpack.c.b16 %v397, %v393
    %v582 = vpack.c.b16 %v398, %v394
    %v583 = vpack.c.b16 %v399, %v395
    %v584 = vpack.c.b16 %v400, %v396
    %v585 = vpack.c.b16 %v405, %v401
    %v586 = vpack.c.b16 %v406, %v402
    %v587 = vpack.c.b16 %v407, %v403
    %v588 = vpack.c.b16 %v408, %v404
    %v589 = vpack.c.b16 %v413, %v409
    %v590 = vpack.c.b16 %v414, %v410
    %v591 = vpack.c.b16 %v415, %v411
    %v592 = vpack.c.b16 %v416, %v412
    %v593 = vpack.c.b16 %v421, %v417
    %v594 = vpack.c.b16 %v422, %v418
    %v595 = vpack.c.b16 %v423, %v419
    %v596 = vpack.c.b16 %v424, %v420
    %v597 = vpack.c.b16 %v429, %v425
    %v598 = vpack.c.b16 %v430, %v426
    %v599 = vpack.c.b16 %v431, %v427
    %v600 = vpack.c.b16 %v432, %v428
    %v601 = vpack.c.b16 %v437, %v433
    %v602 = vpack.c.b16 %v438, %v434
    %v603 = vpack.c.b16 %v439, %v435
    %v604 = vpack.c.b16 %v440, %v436
    %v605 = vpack.c.b16 %v445, %v441
    %v606 = vpack.c.b16 %v446, %v442
    %v607 = vpack.c.b16 %v447, %v443
    %v608 = vpack.c.b16 %v448, %v444
    %v609 = vpack.c.b16 %v453, %v449
    %v610 = vpack.c.b16 %v454, %v450
    %v611 = vpack.c.b16 %v455, %v451
    %v612 = vpack.c.b16 %v456, %v452
    %v613 = vpack.c.b16 %v461, %v457
    %v614 = vpack.c.b16 %v462, %v458
    %v615 = vpack.c.b16 %v463, %v459
    %v616 = vpack.c.b16 %v464, %v460
    %v617 = vpack.c.b16 %v469, %v465
    %v618 = vpack.c.b16 %v470, %v466
    %v619 = vpack.c.b16 %v471, %v467
    %v620 = vpack.c.b16 %v472, %v468
    %v621 = vpack.c.b16 %v477, %v473
    %v622 = vpack.c.b16 %v478, %v474
    %v623 = vpack.c.b16 %v479, %v475
    %v624 = vpack.c.b16 %v480, %v476
    %v625 = vpack.c.b16 %v485, %v481
    %v626 = vpack.c.b16 %v486, %v482
    %v627 = vpack.c.b16 %v487, %v483
    %v628 = vpack.c.b16 %v488, %v484
    %v629 = vpack.c.b16 %v493, %v489
    %v630 = vpack.c.b16 %v494, %v490
    %v631 = vpack.c.b16 %v495, %v491
    %v632 = vpack.c.b16 %v496, %v492
    %v633 = vpack.c.b16 %v501, %v497
    %v634 = vpack.c.b16 %v502, %v498
    %v635 = vpack.c.b16 %v503, %v499
    %v636 = vpack.c.b16 %v504, %v500
    %v637 = vpack.c.b16 %v509, %v505
    %v638 = vpack.c.b16 %v510, %v506
    %v639 = vpack.c.b16 %v511, %v507
    %v640 = vpack.c.b16 %v512, %v508
    %v641 = vpack.c.b16 %v517, %v513
    %v642 = vpack.c.b16 %v518, %v514
    %v643 = vpack.c.b16 %v519, %v515
    %v644 = vpack.c.b16 %v520, %v516
    %v645 = vpack.c.b16 %v525, %v521
    %v646 = vpack.c.b16 %v526, %v522
    %v647 = vpack.c.b16 %v527, %v523
    %v648 = vpack.c.b16 %v528, %v524
    %v649 = vpack.c.b16 %v533, %v529
    %v650 = vpack.c.b16 %v534, %v530
    %v651 = vpack.c.b16 %v535, %v531
    %v652 = vpack.c.b16 %v536, %v532
    %v653 = vpack.c.b16 %v541, %v537
    %v654 = vpack.c.b16 %v542, %v538
    %v655 = vpack.c.b16 %v543, %v539
    %v656 = vpack.c.b16 %v544, %v540
    %v657 = vpack.c.b16 %v549, %v545
    %v658 = vpack.c.b16 %v550, %v546
    %v659 = vpack.c.b16 %v551, %v547
    %v660 = vpack.c.b16 %v552, %v548
    %v661 = vpack.c.b16 %v557, %v553
    %v662 = vpack.c.b16 %v558, %v554
    %v663 = vpack.c.b16 %v559, %v555
    %v664 = vpack.c.b16 %v560, %v556
    %v665 = vpack.c.b16 %v565, %v561
    %v666 = vpack.c.b16 %v566, %v562
    %v667 = vpack.c.b16 %v567, %v563
    %v668 = vpack.c.b16 %v568, %v564
    %v669 = vpack.c.b16 %v573, %v569
    %v670 = vpack.c.b16 %v574, %v570
    %v671 = vpack.c.b16 %v575, %v571
    %v672 = vpack.c.b16 %v576, %v572
    %769 = vmatprep.subr.bf16.mxu0 %v578
    %770 = vmatpush1.bf16.msra.mxu0 %v577
    %771 = vmatprep.subr.bf16.mxu0 %v582
    %772 = vmatpush1.bf16.msra.mxu0 %v581
    %773 = vmatprep.subr.bf16.mxu0 %v586
    %774 = vmatpush1.bf16.msra.mxu0 %v585
    %775 = vmatprep.subr.bf16.mxu0 %v590
    %776 = vmatpush1.bf16.msra.mxu0 %v589
    %777 = vmatprep.subr.bf16.mxu0 %v594
    %778 = vmatpush1.bf16.msra.mxu0 %v593
    %779 = vmatprep.subr.bf16.mxu0 %v598
    %780 = vmatpush1.bf16.msra.mxu0 %v597
    %781 = vmatprep.subr.bf16.mxu0 %v602
    %782 = vmatpush1.bf16.msra.mxu0 %v601
    %783 = vmatprep.subr.bf16.mxu0 %v606
    %784 = vmatpush1.bf16.msra.mxu0 %v605
    %785 = vmatprep.subr.bf16.mxu0 %v610
    %786 = vmatpush1.bf16.msra.mxu0 %v609
    %787 = vmatprep.subr.bf16.mxu0 %v614
    %788 = vmatpush1.bf16.msra.mxu0 %v613
    %789 = vmatprep.subr.bf16.mxu0 %v618
    %790 = vmatpush1.bf16.msra.mxu0 %v617
    %791 = vmatprep.subr.bf16.mxu0 %v622
    %792 = vmatpush1.bf16.msra.mxu0 %v621
    %793 = vmatprep.subr.bf16.mxu0 %v626
    %794 = vmatpush1.bf16.msra.mxu0 %v625
    %795 = vmatprep.subr.bf16.mxu0 %v630
    %796 = vmatpush1.bf16.msra.mxu0 %v629
    %797 = vmatprep.subr.bf16.mxu0 %v634
    %798 = vmatpush1.bf16.msra.mxu0 %v633
    %799 = vmatprep.subr.bf16.mxu0 %v638
    %800 = vmatpush1.bf16.msra.mxu0 %v637
    %801 = vmatprep.mubr.bf16.mxu0 %v169
    %802 = vmatmul.mubr.bf16.gmra.mrb[0].mxu0 %v168
    %v803 = vpop.f32.mrb[0].mxu0
    %v804 = vadd.f32 %v272, %v803
    %v805 = vpop.f32.mrb[0].mxu0
    %v806 = vadd.f32 %v276, %v805
    %v807 = vpop.f32.mrb[0].mxu0
    %v808 = vpop.f32.mrb[0].mxu0
    %809 = vdwg.mxu0
    %810 = vmatprep.subr.bf16.mxu0 %v642
    %811 = vmatpush1.bf16.msra.mxu0 %v641
    %812 = vmatprep.subr.bf16.mxu0 %v646
    %813 = vmatpush1.bf16.msra.mxu0 %v645
    %814 = vmatprep.subr.bf16.mxu0 %v650
    %815 = vmatpush1.bf16.msra.mxu0 %v649
    %816 = vmatprep.subr.bf16.mxu0 %v654
    %817 = vmatpush1.bf16.msra.mxu0 %v653
    %818 = vmatprep.subr.bf16.mxu0 %v658
    %819 = vmatpush1.bf16.msra.mxu0 %v657
    %820 = vmatprep.subr.bf16.mxu0 %v662
    %821 = vmatpush1.bf16.msra.mxu0 %v661
    %822 = vmatprep.subr.bf16.mxu0 %v666
    %823 = vmatpush1.bf16.msra.mxu0 %v665
    %824 = vmatprep.subr.bf16.mxu0 %v670
    %825 = vmatpush1.bf16.msra.mxu0 %v669
    %826 = vmatprep.subr.bf16.mxu0 0
    %827 = vmatpush1.bf16.msra.mxu0 0
    %828 = vmatprep.subr.bf16.mxu0 0
    %829 = vmatpush1.bf16.msra.mxu0 0
    %830 = vmatprep.subr.bf16.mxu0 0
    %831 = vmatpush1.bf16.msra.mxu0 0
    %832 = vmatprep.subr.bf16.mxu0 0
    %833 = vmatpush1.bf16.msra.mxu0 0
    %834 = vmatprep.subr.bf16.mxu0 0
    %835 = vmatpush1.bf16.msra.mxu0 0
    %836 = vmatprep.subr.bf16.mxu0 0
    %837 = vmatpush1.bf16.msra.mxu0 0
    %838 = vmatprep.subr.bf16.mxu0 0
    %839 = vmatpush1.bf16.msra.mxu0 0
    %840 = vmatprep.subr.bf16.mxu0 0
    %841 = vmatpush1.bf16.msra.mxu0 0
    %842 = vmatprep.mubr.bf16.mxu0 0
    %843 = vmatmul.mubr.bf16.gmra.mrb[0].mxu0 %v170
    %v844 = vpop.f32.mrb[0].mxu0
    %v845 = vadd.f32 %v804, %v844
    %v846 = vpop.f32.mrb[0].mxu0
    %v847 = vadd.f32 %v806, %v846
    %v848 = vpop.f32.mrb[0].mxu0
    %v849 = vpop.f32.mrb[0].mxu0
    %850 = vdwg.mxu0
    %851 = vmatprep.subr.bf16.mxu0 %v580
    %852 = vmatpush1.bf16.msra.mxu0 %v579
    %853 = vmatprep.subr.bf16.mxu0 %v584
    %854 = vmatpush1.bf16.msra.mxu0 %v583
    %855 = vmatprep.subr.bf16.mxu0 %v588
    %856 = vmatpush1.bf16.msra.mxu0 %v587
    %857 = vmatprep.subr.bf16.mxu0 %v592
    %858 = vmatpush1.bf16.msra.mxu0 %v591
    %859 = vmatprep.subr.bf16.mxu0 %v596
    %860 = vmatpush1.bf16.msra.mxu0 %v595
    %861 = vmatprep.subr.bf16.mxu0 %v600
    %862 = vmatpush1.bf16.msra.mxu0 %v599
    %863 = vmatprep.subr.bf16.mxu0 %v604
    %864 = vmatpush1.bf16.msra.mxu0 %v603
    %865 = vmatprep.subr.bf16.mxu0 %v608
    %866 = vmatpush1.bf16.msra.mxu0 %v607
    %867 = vmatprep.subr.bf16.mxu0 %v612
    %868 = vmatpush1.bf16.msra.mxu0 %v611
    %869 = vmatprep.subr.bf16.mxu0 %v616
    %870 = vmatpush1.bf16.msra.mxu0 %v615
    %871 = vmatprep.subr.bf16.mxu0 %v620
    %872 = vmatpush1.bf16.msra.mxu0 %v619
    %873 = vmatprep.subr.bf16.mxu0 %v624
    %874 = vmatpush1.bf16.msra.mxu0 %v623
    %875 = vmatprep.subr.bf16.mxu0 %v628
    %876 = vmatpush1.bf16.msra.mxu0 %v627
    %877 = vmatprep.subr.bf16.mxu0 %v632
    %878 = vmatpush1.bf16.msra.mxu0 %v631
    %879 = vmatprep.subr.bf16.mxu0 %v636
    %880 = vmatpush1.bf16.msra.mxu0 %v635
    %881 = vmatprep.subr.bf16.mxu0 %v640
    %882 = vmatpush1.bf16.msra.mxu0 %v639
    %883 = vmatprep.mubr.bf16.mxu0 %v169
    %884 = vmatmul.mubr.bf16.gmra.mrb[0].mxu0 %v168
    %v885 = vpop.f32.mrb[0].mxu0
    %v886 = vadd.f32 %v280, %v885
    %v887 = vpop.f32.mrb[0].mxu0
    %v888 = vadd.f32 %v284, %v887
    %v889 = vpop.f32.mrb[0].mxu0
    %v890 = vpop.f32.mrb[0].mxu0
    %891 = vdwg.mxu0
    %892 = vmatprep.subr.bf16.mxu0 %v644
    %893 = vmatpush1.bf16.msra.mxu0 %v643
    %894 = vmatprep.subr.bf16.mxu0 %v648
    %895 = vmatpush1.bf16.msra.mxu0 %v647
    %896 = vmatprep.subr.bf16.mxu0 %v652
    %897 = vmatpush1.bf16.msra.mxu0 %v651
    %898 = vmatprep.subr.bf16.mxu0 %v656
    %899 = vmatpush1.bf16.msra.mxu0 %v655
    %900 = vmatprep.subr.bf16.mxu0 %v660
    %901 = vmatpush1.bf16.msra.mxu0 %v659
    %902 = vmatprep.subr.bf16.mxu0 %v664
    %903 = vmatpush1.bf16.msra.mxu0 %v663
    %904 = vmatprep.subr.bf16.mxu0 %v668
    %905 = vmatpush1.bf16.msra.mxu0 %v667
    %906 = vmatprep.subr.bf16.mxu0 %v672
    %907 = vmatpush1.bf16.msra.mxu0 %v671
    %908 = vmatprep.subr.bf16.mxu0 0
    %909 = vmatpush1.bf16.msra.mxu0 0
    %910 = vmatprep.subr.bf16.mxu0 0
    %911 = vmatpush1.bf16.msra.mxu0 0
    %912 = vmatprep.subr.bf16.mxu0 0
    %913 = vmatpush1.bf16.msra.mxu0 0
    %914 = vmatprep.subr.bf16.mxu0 0
    %915 = vmatpush1.bf16.msra.mxu0 0
    %916 = vmatprep.subr.bf16.mxu0 0
    %917 = vmatpush1.bf16.msra.mxu0 0
    %918 = vmatprep.subr.bf16.mxu0 0
    %919 = vmatpush1.bf16.msra.mxu0 0
    %920 = vmatprep.subr.bf16.mxu0 0
    %921 = vmatpush1.bf16.msra.mxu0 0
    %922 = vmatprep.subr.bf16.mxu0 0
    %923 = vmatpush1.bf16.msra.mxu0 0
    %924 = vmatprep.mubr.bf16.mxu0 0
    %925 = vmatmul.mubr.bf16.gmra.mrb[0].mxu0 %v170
    %v926 = vpop.f32.mrb[0].mxu0
    %v927 = vadd.f32 %v886, %v926
    %v928 = vpop.f32.mrb[0].mxu0
    %v929 = vadd.f32 %v888, %v928
    %v930 = vpop.f32.mrb[0].mxu0
    %v931 = vpop.f32.mrb[0].mxu0
    %932 = vdwg.mxu0
    %vm933 = vcmp.gt.f32.partialorder %v845, 0.0
    %vm934 = vcmp.gt.f32.partialorder %v847, 0.0
    %vm935 = vcmp.gt.f32.partialorder %v927, 0.0
    %vm936 = vcmp.gt.f32.partialorder %v929, 0.0
    %v937 = vmul.f32 %v845, 0.2
    %v938 = vmul.f32 %v847, 0.2
    %v939 = vmul.f32 %v927, 0.2
    %v940 = vmul.f32 %v929, 0.2
    %v941 = vsel %vm933, %v845, %v937
    %v942 = vsel %vm934, %v847, %v938
    %v943 = vsel %vm935, %v927, %v939
    %v944 = vsel %vm936, %v929, %v940
    %v945 = vpack.c.bf16 %v941, %v941
    %v946 = vpack.c.bf16 %v942, %v942
    %v947 = vpack.c.bf16 %v943, %v943
    %v948 = vpack.c.bf16 %v944, %v944
    %v949 = vld [vmem:[#allocation7] sm:$0xff]
    %v950 = vld [vmem:[#allocation7 + $0x8] sm:$0xff]
    %v951 = vld [vmem:[#allocation7 + $0x10] sm:$0xff]
    %v952 = vld [vmem:[#allocation7 + $0x18] sm:$0xff]
    %v953 = vld [vmem:[#allocation7 + $0x20] sm:$0xff]
    %v954 = vld [vmem:[#allocation7 + $0x28] sm:$0xff]
    %v955 = vld [vmem:[#allocation7 + $0x30] sm:$0xff]
    %v956 = vld [vmem:[#allocation7 + $0x38] sm:$0xff]
    %v957 = vld [vmem:[#allocation7 + $0x40] sm:$0xff]
    %v958 = vld [vmem:[#allocation7 + $0x48] sm:$0xff]
    %v959 = vld [vmem:[#allocation7 + $0x50] sm:$0xff]
    %v960 = vld [vmem:[#allocation7 + $0x58] sm:$0xff]
    %v961 = vld [vmem:[#allocation7 + $0x60] sm:$0xff]
    %v962 = vld [vmem:[#allocation7 + $0x68] sm:$0xff]
    %v963 = vld [vmem:[#allocation7 + $0x70] sm:$0xff]
    %v964 = vld [vmem:[#allocation7 + $0x78] sm:$0xff]
    %v965 = vld [vmem:[#allocation7 + $0x80] sm:$0xff]
    %v966 = vld [vmem:[#allocation7 + $0x88] sm:$0xff]
    %v967 = vld [vmem:[#allocation7 + $0x90] sm:$0xff]
    %v968 = vld [vmem:[#allocation7 + $0x98] sm:$0xff]
    %v969 = vld [vmem:[#allocation7 + $0xa0] sm:$0xff]
    %v970 = vld [vmem:[#allocation7 + $0xa8] sm:$0xff]
    %v971 = vld [vmem:[#allocation7 + $0xb0] sm:$0xff]
    %v972 = vld [vmem:[#allocation7 + $0xb8] sm:$0xff]
    %v973 = vld [vmem:[#allocation7 + $0xc0] sm:$0xff]
    %v974 = vld [vmem:[#allocation7 + $0xc8] sm:$0xff]
    %v975 = vld [vmem:[#allocation7 + $0xd0] sm:$0xff]
    %v976 = vld [vmem:[#allocation7 + $0xd8] sm:$0xff]
    %v977 = vld [vmem:[#allocation7 + $0xe0] sm:$0xff]
    %v978 = vld [vmem:[#allocation7 + $0xe8] sm:$0xff]
    %v979 = vld [vmem:[#allocation7 + $0xf0] sm:$0xff]
    %v980 = vld [vmem:[#allocation7 + $0xf8] sm:$0xff]
    %v981 = vld [vmem:[#allocation7 + $0x100] sm:$0xff]
    %v982 = vld [vmem:[#allocation7 + $0x108] sm:$0xff]
    %v983 = vld [vmem:[#allocation7 + $0x110] sm:$0xff]
    %v984 = vld [vmem:[#allocation7 + $0x118] sm:$0xff]
    %v985 = vld [vmem:[#allocation7 + $0x120] sm:$0xff]
    %v986 = vld [vmem:[#allocation7 + $0x128] sm:$0xff]
    %v987 = vld [vmem:[#allocation7 + $0x130] sm:$0xff]
    %v988 = vld [vmem:[#allocation7 + $0x138] sm:$0xff]
    %v989 = vld [vmem:[#allocation7 + $0x140] sm:$0xff]
    %v990 = vld [vmem:[#allocation7 + $0x148] sm:$0xff]
    %v991 = vld [vmem:[#allocation7 + $0x150] sm:$0xff]
    %v992 = vld [vmem:[#allocation7 + $0x158] sm:$0xff]
    %v993 = vld [vmem:[#allocation7 + $0x160] sm:$0xff]
    %v994 = vld [vmem:[#allocation7 + $0x168] sm:$0xff]
    %v995 = vld [vmem:[#allocation7 + $0x170] sm:$0xff]
    %v996 = vld [vmem:[#allocation7 + $0x178] sm:$0xff]
    %v997 = vld [vmem:[#allocation7 + $0x180] sm:$0xff]
    %v998 = vld [vmem:[#allocation7 + $0x188] sm:$0xff]
    %v999 = vld [vmem:[#allocation7 + $0x190] sm:$0xff]
    %v1000 = vld [vmem:[#allocation7 + $0x198] sm:$0xff]
    %v1001 = vld [vmem:[#allocation7 + $0x1a0] sm:$0xff]
    %v1002 = vld [vmem:[#allocation7 + $0x1a8] sm:$0xff]
    %v1003 = vld [vmem:[#allocation7 + $0x1b0] sm:$0xff]
    %v1004 = vld [vmem:[#allocation7 + $0x1b8] sm:$0xff]
    %v1005 = vld [vmem:[#allocation7 + $0x1c0] sm:$0xff]
    %v1006 = vld [vmem:[#allocation7 + $0x1c8] sm:$0xff]
    %v1007 = vld [vmem:[#allocation7 + $0x1d0] sm:$0xff]
    %v1008 = vld [vmem:[#allocation7 + $0x1d8] sm:$0xff]
    %v1009 = vld [vmem:[#allocation7 + $0x1e0] sm:$0xff]
    %v1010 = vld [vmem:[#allocation7 + $0x1e8] sm:$0xff]
    %v1011 = vld [vmem:[#allocation7 + $0x1f0] sm:$0xff]
    %v1012 = vld [vmem:[#allocation7 + $0x1f8] sm:$0xff]
    %v1013 = vld [vmem:[%s4] sm:$0x3]
    %v1015 = vlaneseq
    %v1016 = vshrl.u32 %v1015, 7
    %v1017 = vsub.s32 0, %v1016
    %v1018 = vrot.slane %v1013, %v1017
    %v1019 = vlaneseq
    %v1020 = vshrl.u32 %v1019, 7
    %v1021 = vsub.s32 1, %v1020
    %v1022 = vrot.slane %v1013, %v1021
    %v1089 = vunpack.c.l.b16 %v949
    %v1090 = vunpack.c.h.b16 %v949
    %v1091 = vunpack.c.l.b16 %v950
    %v1092 = vunpack.c.h.b16 %v950
    %v1093 = vunpack.c.l.b16 %v951
    %v1094 = vunpack.c.h.b16 %v951
    %v1095 = vunpack.c.l.b16 %v952
    %v1096 = vunpack.c.h.b16 %v952
    %v1097 = vunpack.c.l.b16 %v953
    %v1098 = vunpack.c.h.b16 %v953
    %v1099 = vunpack.c.l.b16 %v954
    %v1100 = vunpack.c.h.b16 %v954
    %v1101 = vunpack.c.l.b16 %v955
    %v1102 = vunpack.c.h.b16 %v955
    %v1103 = vunpack.c.l.b16 %v956
    %v1104 = vunpack.c.h.b16 %v956
    %v1105 = vunpack.c.l.b16 %v957
    %v1106 = vunpack.c.h.b16 %v957
    %v1107 = vunpack.c.l.b16 %v958
    %v1108 = vunpack.c.h.b16 %v958
    %v1109 = vunpack.c.l.b16 %v959
    %v1110 = vunpack.c.h.b16 %v959
    %v1111 = vunpack.c.l.b16 %v960
    %v1112 = vunpack.c.h.b16 %v960
    %v1113 = vunpack.c.l.b16 %v961
    %v1114 = vunpack.c.h.b16 %v961
    %v1115 = vunpack.c.l.b16 %v962
    %v1116 = vunpack.c.h.b16 %v962
    %v1117 = vunpack.c.l.b16 %v963
    %v1118 = vunpack.c.h.b16 %v963
    %v1119 = vunpack.c.l.b16 %v964
    %v1120 = vunpack.c.h.b16 %v964
    %v1121 = vunpack.c.l.b16 %v965
    %v1122 = vunpack.c.h.b16 %v965
    %v1123 = vunpack.c.l.b16 %v966
    %v1124 = vunpack.c.h.b16 %v966
    %v1125 = vunpack.c.l.b16 %v967
    %v1126 = vunpack.c.h.b16 %v967
    %v1127 = vunpack.c.l.b16 %v968
    %v1128 = vunpack.c.h.b16 %v968
    %v1129 = vunpack.c.l.b16 %v969
    %v1130 = vunpack.c.h.b16 %v969
    %v1131 = vunpack.c.l.b16 %v970
    %v1132 = vunpack.c.h.b16 %v970
    %v1133 = vunpack.c.l.b16 %v971
    %v1134 = vunpack.c.h.b16 %v971
    %v1135 = vunpack.c.l.b16 %v972
    %v1136 = vunpack.c.h.b16 %v972
    %v1137 = vunpack.c.l.b16 %v973
    %v1138 = vunpack.c.h.b16 %v973
    %v1139 = vunpack.c.l.b16 %v974
    %v1140 = vunpack.c.h.b16 %v974
    %v1141 = vunpack.c.l.b16 %v975
    %v1142 = vunpack.c.h.b16 %v975
    %v1143 = vunpack.c.l.b16 %v976
    %v1144 = vunpack.c.h.b16 %v976
    %v1145 = vunpack.c.l.b16 %v977
    %v1146 = vunpack.c.h.b16 %v977
    %v1147 = vunpack.c.l.b16 %v978
    %v1148 = vunpack.c.h.b16 %v978
    %v1149 = vunpack.c.l.b16 %v979
    %v1150 = vunpack.c.h.b16 %v979
    %v1151 = vunpack.c.l.b16 %v980
    %v1152 = vunpack.c.h.b16 %v980
    %v1153 = vunpack.c.l.b16 %v981
    %v1154 = vunpack.c.h.b16 %v981
    %v1155 = vunpack.c.l.b16 %v982
    %v1156 = vunpack.c.h.b16 %v982
    %v1157 = vunpack.c.l.b16 %v983
    %v1158 = vunpack.c.h.b16 %v983
    %v1159 = vunpack.c.l.b16 %v984
    %v1160 = vunpack.c.h.b16 %v984
    %v1161 = vunpack.c.l.b16 %v985
    %v1162 = vunpack.c.h.b16 %v985
    %v1163 = vunpack.c.l.b16 %v986
    %v1164 = vunpack.c.h.b16 %v986
    %v1165 = vunpack.c.l.b16 %v987
    %v1166 = vunpack.c.h.b16 %v987
    %v1167 = vunpack.c.l.b16 %v988
    %v1168 = vunpack.c.h.b16 %v988
    %v1169 = vunpack.c.l.b16 %v989
    %v1170 = vunpack.c.h.b16 %v989
    %v1171 = vunpack.c.l.b16 %v990
    %v1172 = vunpack.c.h.b16 %v990
    %v1173 = vunpack.c.l.b16 %v991
    %v1174 = vunpack.c.h.b16 %v991
    %v1175 = vunpack.c.l.b16 %v992
    %v1176 = vunpack.c.h.b16 %v992
    %v1177 = vunpack.c.l.b16 %v993
    %v1178 = vunpack.c.h.b16 %v993
    %v1179 = vunpack.c.l.b16 %v994
    %v1180 = vunpack.c.h.b16 %v994
    %v1181 = vunpack.c.l.b16 %v995
    %v1182 = vunpack.c.h.b16 %v995
    %v1183 = vunpack.c.l.b16 %v996
    %v1184 = vunpack.c.h.b16 %v996
    %v1185 = vunpack.c.l.b16 %v997
    %v1186 = vunpack.c.h.b16 %v997
    %v1187 = vunpack.c.l.b16 %v998
    %v1188 = vunpack.c.h.b16 %v998
    %v1189 = vunpack.c.l.b16 %v999
    %v1190 = vunpack.c.h.b16 %v999
    %v1191 = vunpack.c.l.b16 %v1000
    %v1192 = vunpack.c.h.b16 %v1000
    %v1193 = vunpack.c.l.b16 %v1001
    %v1194 = vunpack.c.h.b16 %v1001
    %v1195 = vunpack.c.l.b16 %v1002
    %v1196 = vunpack.c.h.b16 %v1002
    %v1197 = vunpack.c.l.b16 %v1003
    %v1198 = vunpack.c.h.b16 %v1003
    %v1199 = vunpack.c.l.b16 %v1004
    %v1200 = vunpack.c.h.b16 %v1004
    %v1201 = vunpack.c.l.b16 %v1005
    %v1202 = vunpack.c.h.b16 %v1005
    %v1203 = vunpack.c.l.b16 %v1006
    %v1204 = vunpack.c.h.b16 %v1006
    %v1205 = vunpack.c.l.b16 %v1007
    %v1206 = vunpack.c.h.b16 %v1007
    %v1207 = vunpack.c.l.b16 %v1008
    %v1208 = vunpack.c.h.b16 %v1008
    %v1209 = vunpack.c.l.b16 %v1009
    %v1210 = vunpack.c.h.b16 %v1009
    %v1211 = vunpack.c.l.b16 %v1010
    %v1212 = vunpack.c.h.b16 %v1010
    %v1213 = vunpack.c.l.b16 %v1011
    %v1214 = vunpack.c.h.b16 %v1011
    %v1215 = vunpack.c.l.b16 %v1012
    %v1216 = vunpack.c.h.b16 %v1012
    %v1217 = vpack.c.b16 %v1091, %v1089
    %v1218 = vpack.c.b16 %v1092, %v1090
    %v1219 = vpack.c.b16 %v1095, %v1093
    %v1220 = vpack.c.b16 %v1096, %v1094
    %v1221 = vpack.c.b16 %v1099, %v1097
    %v1222 = vpack.c.b16 %v1100, %v1098
    %v1223 = vpack.c.b16 %v1103, %v1101
    %v1224 = vpack.c.b16 %v1104, %v1102
    %v1225 = vpack.c.b16 %v1107, %v1105
    %v1226 = vpack.c.b16 %v1108, %v1106
    %v1227 = vpack.c.b16 %v1111, %v1109
    %v1228 = vpack.c.b16 %v1112, %v1110
    %v1229 = vpack.c.b16 %v1115, %v1113
    %v1230 = vpack.c.b16 %v1116, %v1114
    %v1231 = vpack.c.b16 %v1119, %v1117
    %v1232 = vpack.c.b16 %v1120, %v1118
    %v1233 = vpack.c.b16 %v1123, %v1121
    %v1234 = vpack.c.b16 %v1124, %v1122
    %v1235 = vpack.c.b16 %v1127, %v1125
    %v1236 = vpack.c.b16 %v1128, %v1126
    %v1237 = vpack.c.b16 %v1131, %v1129
    %v1238 = vpack.c.b16 %v1132, %v1130
    %v1239 = vpack.c.b16 %v1135, %v1133
    %v1240 = vpack.c.b16 %v1136, %v1134
    %v1241 = vpack.c.b16 %v1139, %v1137
    %v1242 = vpack.c.b16 %v1140, %v1138
    %v1243 = vpack.c.b16 %v1143, %v1141
    %v1244 = vpack.c.b16 %v1144, %v1142
    %v1245 = vpack.c.b16 %v1147, %v1145
    %v1246 = vpack.c.b16 %v1148, %v1146
    %v1247 = vpack.c.b16 %v1151, %v1149
    %v1248 = vpack.c.b16 %v1152, %v1150
    %v1249 = vpack.c.b16 %v1155, %v1153
    %v1250 = vpack.c.b16 %v1156, %v1154
    %v1251 = vpack.c.b16 %v1159, %v1157
    %v1252 = vpack.c.b16 %v1160, %v1158
    %v1253 = vpack.c.b16 %v1163, %v1161
    %v1254 = vpack.c.b16 %v1164, %v1162
    %v1255 = vpack.c.b16 %v1167, %v1165
    %v1256 = vpack.c.b16 %v1168, %v1166
    %v1257 = vpack.c.b16 %v1171, %v1169
    %v1258 = vpack.c.b16 %v1172, %v1170
    %v1259 = vpack.c.b16 %v1175, %v1173
    %v1260 = vpack.c.b16 %v1176, %v1174
    %v1261 = vpack.c.b16 %v1179, %v1177
    %v1262 = vpack.c.b16 %v1180, %v1178
    %v1263 = vpack.c.b16 %v1183, %v1181
    %v1264 = vpack.c.b16 %v1184, %v1182
    %v1265 = vpack.c.b16 %v1187, %v1185
    %v1266 = vpack.c.b16 %v1188, %v1186
    %v1267 = vpack.c.b16 %v1191, %v1189
    %v1268 = vpack.c.b16 %v1192, %v1190
    %v1269 = vpack.c.b16 %v1195, %v1193
    %v1270 = vpack.c.b16 %v1196, %v1194
    %v1271 = vpack.c.b16 %v1199, %v1197
    %v1272 = vpack.c.b16 %v1200, %v1198
    %v1273 = vpack.c.b16 %v1203, %v1201
    %v1274 = vpack.c.b16 %v1204, %v1202
    %v1275 = vpack.c.b16 %v1207, %v1205
    %v1276 = vpack.c.b16 %v1208, %v1206
    %v1277 = vpack.c.b16 %v1211, %v1209
    %v1278 = vpack.c.b16 %v1212, %v1210
    %v1279 = vpack.c.b16 %v1215, %v1213
    %v1280 = vpack.c.b16 %v1216, %v1214
    %1345 = vmatprep.subr.bf16.mxu0 %v1218
    %1346 = vmatpush1.bf16.msra.mxu0 %v1217
    %1347 = vmatprep.subr.bf16.mxu0 %v1220
    %1348 = vmatpush1.bf16.msra.mxu0 %v1219
    %1349 = vmatprep.subr.bf16.mxu0 %v1222
    %1350 = vmatpush1.bf16.msra.mxu0 %v1221
    %1351 = vmatprep.subr.bf16.mxu0 %v1224
    %1352 = vmatpush1.bf16.msra.mxu0 %v1223
    %1353 = vmatprep.subr.bf16.mxu0 %v1226
    %1354 = vmatpush1.bf16.msra.mxu0 %v1225
    %1355 = vmatprep.subr.bf16.mxu0 %v1228
    %1356 = vmatpush1.bf16.msra.mxu0 %v1227
    %1357 = vmatprep.subr.bf16.mxu0 %v1230
    %1358 = vmatpush1.bf16.msra.mxu0 %v1229
    %1359 = vmatprep.subr.bf16.mxu0 %v1232
    %1360 = vmatpush1.bf16.msra.mxu0 %v1231
    %1361 = vmatprep.subr.bf16.mxu0 %v1234
    %1362 = vmatpush1.bf16.msra.mxu0 %v1233
    %1363 = vmatprep.subr.bf16.mxu0 %v1236
    %1364 = vmatpush1.bf16.msra.mxu0 %v1235
    %1365 = vmatprep.subr.bf16.mxu0 %v1238
    %1366 = vmatpush1.bf16.msra.mxu0 %v1237
    %1367 = vmatprep.subr.bf16.mxu0 %v1240
    %1368 = vmatpush1.bf16.msra.mxu0 %v1239
    %1369 = vmatprep.subr.bf16.mxu0 %v1242
    %1370 = vmatpush1.bf16.msra.mxu0 %v1241
    %1371 = vmatprep.subr.bf16.mxu0 %v1244
    %1372 = vmatpush1.bf16.msra.mxu0 %v1243
    %1373 = vmatprep.subr.bf16.mxu0 %v1246
    %1374 = vmatpush1.bf16.msra.mxu0 %v1245
    %1375 = vmatprep.subr.bf16.mxu0 %v1248
    %1376 = vmatpush1.bf16.msra.mxu0 %v1247
    %1377 = vmatprep.mubr.bf16.mxu0 %v946
    %1378 = vmatmul.mubr.bf16.gmra.mrb[0].mxu0 %v945
    %v1379 = vpop.f32.mrb[0].mxu0
    %v1380 = vadd.f32 %v1018, %v1379
    %v1381 = vpop.f32.mrb[0].mxu0
    %v1382 = vadd.f32 %v1022, %v1381
    %v1383 = vpop.f32.mrb[0].mxu0
    %v1384 = vpop.f32.mrb[0].mxu0
    %1385 = vdwg.mxu0
    %1386 = vmatprep.subr.bf16.mxu0 %v1250
    %1387 = vmatpush1.bf16.msra.mxu0 %v1249
    %1388 = vmatprep.subr.bf16.mxu0 %v1252
    %1389 = vmatpush1.bf16.msra.mxu0 %v1251
    %1390 = vmatprep.subr.bf16.mxu0 %v1254
    %1391 = vmatpush1.bf16.msra.mxu0 %v1253
    %1392 = vmatprep.subr.bf16.mxu0 %v1256
    %1393 = vmatpush1.bf16.msra.mxu0 %v1255
    %1394 = vmatprep.subr.bf16.mxu0 %v1258
    %1395 = vmatpush1.bf16.msra.mxu0 %v1257
    %1396 = vmatprep.subr.bf16.mxu0 %v1260
    %1397 = vmatpush1.bf16.msra.mxu0 %v1259
    %1398 = vmatprep.subr.bf16.mxu0 %v1262
    %1399 = vmatpush1.bf16.msra.mxu0 %v1261
    %1400 = vmatprep.subr.bf16.mxu0 %v1264
    %1401 = vmatpush1.bf16.msra.mxu0 %v1263
    %1402 = vmatprep.subr.bf16.mxu0 %v1266
    %1403 = vmatpush1.bf16.msra.mxu0 %v1265
    %1404 = vmatprep.subr.bf16.mxu0 %v1268
    %1405 = vmatpush1.bf16.msra.mxu0 %v1267
    %1406 = vmatprep.subr.bf16.mxu0 %v1270
    %1407 = vmatpush1.bf16.msra.mxu0 %v1269
    %1408 = vmatprep.subr.bf16.mxu0 %v1272
    %1409 = vmatpush1.bf16.msra.mxu0 %v1271
    %1410 = vmatprep.subr.bf16.mxu0 %v1274
    %1411 = vmatpush1.bf16.msra.mxu0 %v1273
    %1412 = vmatprep.subr.bf16.mxu0 %v1276
    %1413 = vmatpush1.bf16.msra.mxu0 %v1275
    %1414 = vmatprep.subr.bf16.mxu0 %v1278
    %1415 = vmatpush1.bf16.msra.mxu0 %v1277
    %1416 = vmatprep.subr.bf16.mxu0 %v1280
    %1417 = vmatpush1.bf16.msra.mxu0 %v1279
    %1418 = vmatprep.mubr.bf16.mxu0 %v948
    %1419 = vmatmul.mubr.bf16.gmra.mrb[0].mxu0 %v947
    %v1420 = vpop.f32.mrb[0].mxu0
    %v1421 = vadd.f32 %v1380, %v1420
    %v1422 = vpop.f32.mrb[0].mxu0
    %v1423 = vadd.f32 %v1382, %v1422
    %v1424 = vpop.f32.mrb[0].mxu0
    %v1425 = vpop.f32.mrb[0].mxu0
    %1426 = vdwg.mxu0
    %vm1427 = vcmp.gt.f32.partialorder %v1421, 0.0
    %vm1428 = vcmp.gt.f32.partialorder %v1423, 0.0
    %v1429 = vmul.f32 %v1421, 0.2
    %v1430 = vmul.f32 %v1423, 0.2
    %v1431 = vsel %vm1427, %v1421, %v1429
    %v1432 = vsel %vm1428, %v1423, %v1430
    %v1433 = vld [vmem:[%s5] sm:$0x3]
    %v1435 = vlaneseq
    %v1436 = vshrl.u32 %v1435, 7
    %v1437 = vsub.s32 0, %v1436
    %v1438 = vrot.slane %v1433, %v1437
    %v1439 = vlaneseq
    %v1440 = vshrl.u32 %v1439, 7
    %v1441 = vsub.s32 1, %v1440
    %v1442 = vrot.slane %v1433, %v1441
    %v1445 = vmul.f32 %v1431, %v1438
    %v1446 = vmul.f32 %v1432, %v1442
    %v1447 = vadd.f32 %v1445, %v1446
    %1448 = vadd.xlane.f32.xlu0 %v1447
    %v1449 = vpop.xlane.xlu0 %1448
    %s1450 = sld [smem:[#allocation2]]
    %v1451 = vstv %s1450
    %v1452 = vadd.f32 %v1449, %v1451
    %vm1453 = vcmask 7168
    %1454 = vst.msk [vmem:[%s7] sm:$0xff] %vm1453, %v1452
    // Predicated region
    $region42: #{tpu_custom_call.1} parent=1 // pred_check
      _
    $region43: #{tpu_custom_call.1} parent=1 // pred_check_branch
      %1456 = sbr.rel (0) target = $region45
    $region44: #{tpu_custom_call.1} parent=1 // pred_region
      _
    $region45: #{tpu_custom_call.1} parent=1 // pred_fallthru
      _
    // Predicated region
    $region46: #{tpu_custom_call.1} parent=1 // pred_check
      _
    $region47: #{tpu_custom_call.1} parent=1 // pred_check_branch
      %1458 = sbr.rel (0) target = $region49
    $region48: #{tpu_custom_call.1} parent=1 // pred_region
      _
    $region49: #{tpu_custom_call.1} parent=1 // pred_fallthru
      _
    %1459 = vsyncpa [#allocation4], 1
    %1460 = vsyncpa [#allocation6], 1

</llo_original>
